<compile_context>
chip_gen: v6e
topology: v6e:2x2x1
jax: 0.10.0
libtpu: 0.0.40
codegen_flags: <defaults>
</compile_context>

<pallas_src>
import functools

import jax
import jax.numpy as jnp
from jax.experimental import pallas as pl
from jax.experimental.pallas import tpu as pltpu


def _vmem_capacity_bytes():
    """Per-core VMEM capacity; conservative (v7x) fallback if query fails."""
    try:
        info = pltpu.get_tpu_info()
        cap = getattr(info, "vmem_capacity_bytes", None)
        if cap:
            return int(cap)
    except Exception:
        pass
    return 64 * 1024 * 1024


def _vmem_budgets():
    """(scoped vmem limit, reduce-kernel sx block budget, normalize block budget)."""
    cap = _vmem_capacity_bytes()
    # v7x (64 MiB)  -> 48 MiB scoped limit; v5e/v6e (128 MiB) -> 96 MiB.
    limit = min(cap * 3 // 4, 96 * 1024 * 1024)
    headroom = 4 * 1024 * 1024
    # Reduce kernel: the only large buffers are the 2 sx input buffers.
    reduce_block = min(16 * 1024 * 1024, max(1 << 20, (limit - headroom) // 2))
    # Normalize kernel: 2 input + 2 output buffers of the same block size.
    norm_block = min(8 * 1024 * 1024, max(1 << 20, (limit - headroom) // 4))
    return limit, reduce_block, norm_block


def _pick_t_block(T, L, itemsize, budget):
    """Largest lane-dense (multiple of 128) tile dividing T whose single-row
    (p_blk=1) slab fits the budget; full axis if T isn't a multiple of 128."""
    if T % 128 != 0:
        # Last block dim must equal the full axis when not a multiple of 128.
        # TODO(synk): for small/odd T, pack (L, T) into a merged lane-dense axis
        # so the normalize store path uses unmasked vst instead of partial stores.
        return T
    row_bytes = L * itemsize
    best = 128
    for t in range(128, T + 1, 128):
        if T % t == 0 and t * row_bytes <= budget:
            best = t
    return best


def _pick_p_block(P, L, t_blk, itemsize, budget, min_tiles=1):
    """Largest divisor of P keeping an sx block under budget (never exceeds it).
    min_tiles > 1 forces a P split so megacore (v7x) can shard the grid axis."""
    cap = max(1, budget // (L * t_blk * itemsize))
    if min_tiles > 1:
        cap = min(cap, max(1, P // min_tiles))
    cap = min(cap, P)
    for d in range(cap, 0, -1):
        if P % d == 0:
            return d
    return 1


def _sbn_reduce_kernel(sx_ref, mu_ref, c_ref, new_mu_ref, inv_ref, acc_ref,
                       *, batch_size, inv_count):
    # sx_ref: (p_blk, L, t_blk); stats refs / scratch: (p_blk, L, 1).
    b = pl.program_id(1)
    t = pl.program_id(2)

    @pl.when((b == 0) & (t == 0))
    def _init():
        acc_ref[...] = jnp.zeros_like(acc_ref)

    # Partial sum over this (batch element, time tile); accumulate in float32.
    # TODO(synk): on v5e with bf16 inputs, an MXU matmul against a ones column
    # would absorb the upcast + lane reduction, but the kernel is HBM-bound.
    acc_ref[...] += jnp.sum(sx_ref[...].astype(jnp.float32), axis=-1, keepdims=True)

    @pl.when((b == pl.num_programs(1) - 1) & (t == pl.num_programs(2) - 1))
    def _finalize():
        # batch_mu = sx.mean(dim=0).mean(dim=-1) == sum over (B, T) / (B*T)
        batch_mu = acc_ref[...] * inv_count
        new_mu = ((1.0 / (batch_size + 1)) * mu_ref[...].astype(jnp.float32)
                  + (float(batch_size) / (batch_size + 1)) * batch_mu)
        new_mu_ref[...] = new_mu.astype(new_mu_ref.dtype)
        # Exact reciprocal on the tiny (p_blk, L, 1) tile; the big tensor only
        # sees a multiply in phase 2 (no full-tensor divide on the VPU).
        denom = 0.001 + c_ref[...].astype(jnp.float32) * new_mu
        inv_ref[...] = (1.0 / denom).astype(inv_ref.dtype)


def _sbn_normalize_kernel(sx_ref, inv_ref, out_ref):
    # inv (p_blk, L, 1) is layout-aligned with sx (p_blk, L, t_blk): the multiply
    # broadcasts along lanes as a stride-0 splat.  Compute in sx's dtype (keeps
    # bf16 on the bf16-native VALU; exact for f32).
    inv = inv_ref[...].astype(sx_ref.dtype)
    out_ref[...] = (sx_ref[...] * inv).astype(out_ref.dtype)


def scattering_batch_norm(sx, mu, c, training=True):
    """Pallas implementation of ScatteringBatchNorm.forward.

    Args:
      sx: (B, P, L, T) scattering coefficients.
      mu: (P, L) running mean buffer (zeros at init).
      c:  (P, L) featurewise constant buffer (0.001 at init).
    Returns:
      (normalized sx, updated mu)  -- the buffer update is returned functionally
      rather than mutated in place.
    """
    B, P, L, T = sx.shape
    assert mu.shape == (P, L) and c.shape == (P, L)
    itemsize = jnp.dtype(sx.dtype).itemsize
    vmem_limit, reduce_budget, norm_budget = _vmem_budgets()

    # Carry stats as (P, L, 1) so their blocks layout-match sx blocks.
    mu3 = mu.reshape(P, L, 1)
    c3 = c.reshape(P, L, 1)

    if training:
        t_blk = _pick_t_block(T, L, itemsize, reduce_budget)
        p_blk = _pick_p_block(P, L, t_blk, itemsize, reduce_budget, min_tiles=2)
        num_p, num_t = P // p_blk, T // t_blk

        reduce_fn = pl.pallas_call(
            functools.partial(_sbn_reduce_kernel,
                              batch_size=B, inv_count=1.0 / (B * T)),
            out_shape=(
                jax.ShapeDtypeStruct((P, L, 1), mu.dtype),     # new_mu
                jax.ShapeDtypeStruct((P, L, 1), jnp.float32),  # inv_denom
            ),
            grid=(num_p, B, num_t),
            in_specs=[
                pl.BlockSpec((pl.Squeezed(), p_blk, L, t_blk),
                             lambda p, b, t: (b, p, 0, t)),
                pl.BlockSpec((p_blk, L, 1), lambda p, b, t: (p, 0, 0)),
                pl.BlockSpec((p_blk, L, 1), lambda p, b, t: (p, 0, 0)),
            ],
            out_specs=(
                pl.BlockSpec((p_blk, L, 1), lambda p, b, t: (p, 0, 0)),
                pl.BlockSpec((p_blk, L, 1), lambda p, b, t: (p, 0, 0)),
            ),
            scratch_shapes=[pltpu.VMEM((p_blk, L, 1), jnp.float32)],
            compiler_params=pltpu.CompilerParams(
                dimension_semantics=("parallel", "arbitrary", "arbitrary"),
                vmem_limit_bytes=vmem_limit),
        )
        new_mu3, inv_denom = reduce_fn(sx, mu3, c3)
    else:
        # Eval mode: no stats update; the tiny (P, L, 1) reciprocal stays in JAX glue.
        new_mu3 = mu3
        inv_denom = 1.0 / (0.001 + c3.astype(jnp.float32) * mu3.astype(jnp.float32))

    t_blk = _pick_t_block(T, L, itemsize, norm_budget)
    p_blk = _pick_p_block(P, L, t_blk, itemsize, norm_budget)
    num_p, num_t = P // p_blk, T // t_blk

    normalize_fn = pl.pallas_call(
        _sbn_normalize_kernel,
        out_shape=jax.ShapeDtypeStruct((B, P, L, T), sx.dtype),
        grid=(num_p, B, num_t),
        in_specs=[
            pl.BlockSpec((pl.Squeezed(), p_blk, L, t_blk),
                         lambda p, b, t: (b, p, 0, t)),
            pl.BlockSpec((p_blk, L, 1), lambda p, b, t: (p, 0, 0)),
        ],
        out_specs=pl.BlockSpec((pl.Squeezed(), p_blk, L, t_blk),
                               lambda p, b, t: (b, p, 0, t)),
        compiler_params=pltpu.CompilerParams(
            dimension_semantics=("parallel", "parallel", "parallel"),
            vmem_limit_bytes=vmem_limit),
    )
    out = normalize_fn(sx, inv_denom)
    return out, new_mu3.reshape(P, L)


def _reference_forward(sx, mu, c):
    B = sx.shape[0]
    batch_mu = sx.mean(axis=0).mean(axis=-1)
    new_mu = (1.0 / (B + 1)) * mu + (B / (B + 1)) * batch_mu
    out = sx / (0.001 + (c * new_mu)[None, :, :, None])
    return out, new_mu


def _run_case(B, P, L, T, seed=0):
    key = jax.random.PRNGKey(seed)
    sx = jnp.abs(jax.random.normal(key, (B, P, L, T), dtype=jnp.float32))
    # Deterministic buffer init matching __init__:
    #   mu = zeros(path_shape),  c = full(path_shape, 0.001)
    mu = jnp.zeros((P, L), dtype=jnp.float32)
    c = jnp.full((P, L), 0.001, dtype=jnp.float32)

    ref_out, ref_mu = _reference_forward(sx, mu, c)

    sbn = jax.jit(functools.partial(scattering_batch_norm, training=True))
    out, new_mu = sbn(sx, mu, c)
    out = jax.block_until_ready(out)
    new_mu = jax.block_until_ready(new_mu)

    assert out.shape == (B, P, L, T)
    assert new_mu.shape == (P, L)
    assert jnp.allclose(out, ref_out, rtol=1e-5, atol=1e-5), "output mismatch"
    assert jnp.allclose(new_mu, ref_mu, rtol=1e-5, atol=1e-5), "mu mismatch"


if __name__ == "__main__":
    # Small shapes consistent with the module: path_shape = (P, L), input (B, P, L, T).
    _run_case(B=2, P=4, L=8, T=16)     # T not a multiple of 128 -> full-axis lane tile
    _run_case(B=2, P=4, L=8, T=256)    # lane-dense (multiple-of-128) tiling path
    print("KERNEL_OK")
</pallas_src>

<mosaic_0001>
module attributes {stable_mosaic.version = 11 : i64} {
  func.func @_sbn_normalize_kernel(%arg0: i32, %arg1: i32, %arg2: i32, %arg3: memref<1x4x8x16xf32, #tpu.memory_space<vmem>>, %arg4: memref<4x8x1xf32, #tpu.memory_space<vmem>>, %arg5: memref<1x4x8x16xf32, #tpu.memory_space<vmem>>) attributes {dimension_semantics = [#tpu.dimension_semantics<parallel>, #tpu.dimension_semantics<parallel>, #tpu.dimension_semantics<parallel>], iteration_bounds = array<i64: 1, 2, 1>, scalar_prefetch = 0 : i64, scratch_operands = 0 : i64, tpu.core_type = #tpu.core_type<tc>, window_params = [{transform_indices = @transform_0, window_bounds = array<i64: 1, 4, 8, 16>}, {transform_indices = @transform_1, window_bounds = array<i64: 4, 8, 1>}, {transform_indices = @transform_2, window_bounds = array<i64: 1, 4, 8, 16>}]} {
    %c0 = arith.constant 0 : index
    %c0_0 = arith.constant 0 : index
    %c0_1 = arith.constant 0 : index
    %0 = vector.load %arg4[%c0, %c0_0, %c0_1] : memref<4x8x1xf32, #tpu.memory_space<vmem>>, vector<4x8x1xf32>
    %c0_2 = arith.constant 0 : index
    %c0_3 = arith.constant 0 : index
    %c0_4 = arith.constant 0 : index
    %c0_5 = arith.constant 0 : index
    %1 = vector.load %arg3[%c0_2, %c0_3, %c0_4, %c0_5] : memref<1x4x8x16xf32, #tpu.memory_space<vmem>>, vector<1x4x8x16xf32>
    %2 = vector.shape_cast %1 : vector<1x4x8x16xf32> to vector<4x8x16xf32>
    %3 = vector.broadcast %0 : vector<4x8x1xf32> to vector<4x8x16xf32>
    %4 = arith.mulf %2, %3 : vector<4x8x16xf32>
    %c0_6 = arith.constant 0 : index
    %c0_7 = arith.constant 0 : index
    %c0_8 = arith.constant 0 : index
    %c0_9 = arith.constant 0 : index
    %5 = vector.load %arg5[%c0_6, %c0_7, %c0_8, %c0_9] : memref<1x4x8x16xf32, #tpu.memory_space<vmem>>, vector<1x4x8x16xf32>
    %6 = vector.shape_cast %5 : vector<1x4x8x16xf32> to vector<4x8x16xf32>
    %7 = vector.shape_cast %4 : vector<4x8x16xf32> to vector<1x4x8x16xf32>
    tpu.vector_store %arg5[%c0_6, %c0_7, %c0_8, %c0_9], %7 {strides = array<i32>} : memref<1x4x8x16xf32, #tpu.memory_space<vmem>>, vector<1x4x8x16xf32>,
    return
  }
  func.func @transform_0(%arg0: i32, %arg1: i32, %arg2: i32) -> (i32, i32, i32, i32) {
    %c0_i32 = arith.constant 0 : i32
    %c0_i32_0 = arith.constant 0 : i32
    return %arg1, %arg0, %c0_i32, %arg2 : i32, i32, i32, i32
  }
  func.func @transform_1(%arg0: i32, %arg1: i32, %arg2: i32) -> (i32, i32, i32) {
    %c0_i32 = arith.constant 0 : i32
    %c0_i32_0 = arith.constant 0 : i32
    %c0_i32_1 = arith.constant 0 : i32
    return %arg0, %c0_i32, %c0_i32_0 : i32, i32, i32
  }
  func.func @transform_2(%arg0: i32, %arg1: i32, %arg2: i32) -> (i32, i32, i32, i32) {
    %c0_i32 = arith.constant 0 : i32
    %c0_i32_0 = arith.constant 0 : i32
    return %arg1, %arg0, %c0_i32, %arg2 : i32, i32, i32, i32
  }
}

module attributes {stable_mosaic.version = 11 : i64} {
  func.func @_sbn_reduce_kernel(%arg0: i32, %arg1: i32, %arg2: i32, %arg3: memref<1x2x8x16xf32, #tpu.memory_space<vmem>>, %arg4: memref<2x8x1xf32, #tpu.memory_space<vmem>>, %arg5: memref<2x8x1xf32, #tpu.memory_space<vmem>>, %arg6: memref<2x8x1xf32, #tpu.memory_space<vmem>>, %arg7: memref<2x8x1xf32, #tpu.memory_space<vmem>>, %arg8: memref<2x8x1xf32, #tpu.memory_space<vmem>>) attributes {dimension_semantics = [#tpu.dimension_semantics<parallel>, #tpu.dimension_semantics<arbitrary>, #tpu.dimension_semantics<arbitrary>], iteration_bounds = array<i64: 2, 2, 1>, scalar_prefetch = 0 : i64, scratch_operands = 1 : i64, tpu.core_type = #tpu.core_type<tc>, window_params = [{transform_indices = @transform_0, window_bounds = array<i64: 1, 2, 8, 16>}, {transform_indices = @transform_1, window_bounds = array<i64: 2, 8, 1>}, {transform_indices = @transform_2, window_bounds = array<i64: 2, 8, 1>}, {transform_indices = @transform_3, window_bounds = array<i64: 2, 8, 1>}, {transform_indices = @transform_4, window_bounds = array<i64: 2, 8, 1>}]} {
    %c0_i32 = arith.constant 0 : i32
    %0 = arith.cmpi eq, %arg1, %c0_i32 : i32
    %c0_i32_0 = arith.constant 0 : i32
    %1 = arith.cmpi eq, %arg2, %c0_i32_0 : i32
    %2 = arith.andi %0, %1 : i1
    %3 = arith.extui %2 : i1 to i32
    %c0_i32_1 = arith.constant 0 : i32
    %4 = arith.cmpi ne, %3, %c0_i32_1 : i32
    scf.if %4 {
      %cst_13 = arith.constant 0.000000e+00 : f32
      %17 = vector.broadcast %cst_13 : f32 to vector<2x8x1xf32>
      %c0_14 = arith.constant 0 : index
      %c0_15 = arith.constant 0 : index
      %c0_16 = arith.constant 0 : index
      %18 = vector.load %arg8[%c0_14, %c0_15, %c0_16] : memref<2x8x1xf32, #tpu.memory_space<vmem>>, vector<2x8x1xf32>
      tpu.vector_store %arg8[%c0_14, %c0_15, %c0_16], %17 {strides = array<i32>} : memref<2x8x1xf32, #tpu.memory_space<vmem>>, vector<2x8x1xf32>,
    } else {
    }
    %c0 = arith.constant 0 : index
    %c0_2 = arith.constant 0 : index
    %c0_3 = arith.constant 0 : index
    %5 = vector.load %arg8[%c0, %c0_2, %c0_3] : memref<2x8x1xf32, #tpu.memory_space<vmem>>, vector<2x8x1xf32>
    %c0_4 = arith.constant 0 : index
    %c0_5 = arith.constant 0 : index
    %c0_6 = arith.constant 0 : index
    %c0_7 = arith.constant 0 : index
    %6 = vector.load %arg3[%c0_4, %c0_5, %c0_6, %c0_7] : memref<1x2x8x16xf32, #tpu.memory_space<vmem>>, vector<1x2x8x16xf32>
    %7 = vector.shape_cast %6 : vector<1x2x8x16xf32> to vector<2x8x16xf32>
    %cst = arith.constant dense<0.000000e+00> : vector<2x8xf32>
    %8 = vector.multi_reduction <add>, %7, %cst [2] : vector<2x8x16xf32> to vector<2x8xf32>
    %9 = vector.shape_cast %8 : vector<2x8xf32> to vector<2x8x1xf32>
    %10 = arith.addf %5, %9 : vector<2x8x1xf32>
    %c0_8 = arith.constant 0 : index
    %c0_9 = arith.constant 0 : index
    %c0_10 = arith.constant 0 : index
    %11 = vector.load %arg8[%c0_8, %c0_9, %c0_10] : memref<2x8x1xf32, #tpu.memory_space<vmem>>, vector<2x8x1xf32>
    tpu.vector_store %arg8[%c0_8, %c0_9, %c0_10], %10 {strides = array<i32>} : memref<2x8x1xf32, #tpu.memory_space<vmem>>, vector<2x8x1xf32>,
    %c1_i32 = arith.constant 1 : i32
    %12 = arith.cmpi eq, %arg1, %c1_i32 : i32
    %c0_i32_11 = arith.constant 0 : i32
    %13 = arith.cmpi eq, %arg2, %c0_i32_11 : i32
    %14 = arith.andi %12, %13 : i1
    %15 = arith.extui %14 : i1 to i32
    %c0_i32_12 = arith.constant 0 : i32
    %16 = arith.cmpi ne, %15, %c0_i32_12 : i32
    scf.if %16 {
      %c0_13 = arith.constant 0 : index
      %c0_14 = arith.constant 0 : index
      %c0_15 = arith.constant 0 : index
      %17 = vector.load %arg8[%c0_13, %c0_14, %c0_15] : memref<2x8x1xf32, #tpu.memory_space<vmem>>, vector<2x8x1xf32>
      %cst_16 = arith.constant 3.125000e-02 : f32
      %18 = vector.broadcast %cst_16 : f32 to vector<2x8x1xf32>
      %19 = arith.mulf %17, %18 : vector<2x8x1xf32>
      %c0_17 = arith.constant 0 : index
      %c0_18 = arith.constant 0 : index
      %c0_19 = arith.constant 0 : index
      %20 = vector.load %arg4[%c0_17, %c0_18, %c0_19] : memref<2x8x1xf32, #tpu.memory_space<vmem>>, vector<2x8x1xf32>
      %cst_20 = arith.constant 0.333333343 : f32
      %21 = vector.broadcast %cst_20 : f32 to vector<2x8x1xf32>
      %22 = arith.mulf %21, %20 : vector<2x8x1xf32>
      %cst_21 = arith.constant 0.666666686 : f32
      %23 = vector.broadcast %cst_21 : f32 to vector<2x8x1xf32>
      %24 = arith.mulf %23, %19 : vector<2x8x1xf32>
      %25 = arith.addf %22, %24 : vector<2x8x1xf32>
      %c0_22 = arith.constant 0 : index
      %c0_23 = arith.constant 0 : index
      %c0_24 = arith.constant 0 : index
      %26 = vector.load %arg6[%c0_22, %c0_23, %c0_24] : memref<2x8x1xf32, #tpu.memory_space<vmem>>, vector<2x8x1xf32>
      tpu.vector_store %arg6[%c0_22, %c0_23, %c0_24], %25 {strides = array<i32>} : memref<2x8x1xf32, #tpu.memory_space<vmem>>, vector<2x8x1xf32>,
      %c0_25 = arith.constant 0 : index
      %c0_26 = arith.constant 0 : index
      %c0_27 = arith.constant 0 : index
      %27 = vector.load %arg5[%c0_25, %c0_26, %c0_27] : memref<2x8x1xf32, #tpu.memory_space<vmem>>, vector<2x8x1xf32>
      %28 = arith.mulf %27, %25 : vector<2x8x1xf32>
      %cst_28 = arith.constant 1.000000e-03 : f32
      %29 = vector.broadcast %cst_28 : f32 to vector<2x8x1xf32>
      %30 = arith.addf %29, %28 : vector<2x8x1xf32>
      %cst_29 = arith.constant 1.000000e+00 : f32
      %31 = vector.broadcast %cst_29 : f32 to vector<2x8x1xf32>
      %32 = arith.divf %31, %30 : vector<2x8x1xf32>
      %c0_30 = arith.constant 0 : index
      %c0_31 = arith.constant 0 : index
      %c0_32 = arith.constant 0 : index
      %33 = vector.load %arg7[%c0_30, %c0_31, %c0_32] : memref<2x8x1xf32, #tpu.memory_space<vmem>>, vector<2x8x1xf32>
      tpu.vector_store %arg7[%c0_30, %c0_31, %c0_32], %32 {strides = array<i32>} : memref<2x8x1xf32, #tpu.memory_space<vmem>>, vector<2x8x1xf32>,
    } else {
    }
    return
  }
  func.func @transform_0(%arg0: i32, %arg1: i32, %arg2: i32) -> (i32, i32, i32, i32) {
    %c0_i32 = arith.constant 0 : i32
    %c0_i32_0 = arith.constant 0 : i32
    return %arg1, %arg0, %c0_i32, %arg2 : i32, i32, i32, i32
  }
  func.func @transform_1(%arg0: i32, %arg1: i32, %arg2: i32) -> (i32, i32, i32) {
    %c0_i32 = arith.constant 0 : i32
    %c0_i32_0 = arith.constant 0 : i32
    %c0_i32_1 = arith.constant 0 : i32
    return %arg0, %c0_i32, %c0_i32_0 : i32, i32, i32
  }
  func.func @transform_2(%arg0: i32, %arg1: i32, %arg2: i32) -> (i32, i32, i32) {
    %c0_i32 = arith.constant 0 : i32
    %c0_i32_0 = arith.constant 0 : i32
    %c0_i32_1 = arith.constant 0 : i32
    return %arg0, %c0_i32, %c0_i32_0 : i32, i32, i32
  }
  func.func @transform_3(%arg0: i32, %arg1: i32, %arg2: i32) -> (i32, i32, i32) {
    %c0_i32 = arith.constant 0 : i32
    %c0_i32_0 = arith.constant 0 : i32
    %c0_i32_1 = arith.constant 0 : i32
    return %arg0, %c0_i32, %c0_i32_0 : i32, i32, i32
  }
  func.func @transform_4(%arg0: i32, %arg1: i32, %arg2: i32) -> (i32, i32, i32) {
    %c0_i32 = arith.constant 0 : i32
    %c0_i32_0 = arith.constant 0 : i32
    %c0_i32_1 = arith.constant 0 : i32
    return %arg0, %c0_i32, %c0_i32_0 : i32, i32, i32
  }
}

</mosaic_0001>

<llo_original>
// kernel: scattering_batch_norm.2
$region0: #{scattering_batch_norm.2}
  #allocation0 [shape = 'u32[]', space=smem, size = 0x4, offset = 0x4, fixed_abs, tag = 'smem constant byte address 0x4 - core index']
  #allocation1 [shape = 'u32[144,128]{1,0:T(1,128)}', space=vmem, size = 0x12000, scoped, tag = 'internal scratch']
  #allocation2 [shape = 'f32[2,8,1]{2,1,0:T(8,128)}', space=vmem, size = 0x2000, scoped, tag = 'scratch operand']
  %s0 = inlined_call_operand.vmem [shape: f32[2,4,8,16], index: 0, kind: input, shape index: {}]
  %s1 = inlined_call_operand.vmem [shape: f32[4,8,1], index: 1, kind: input, shape index: {}]
  %s2 = inlined_call_operand.vmem [shape: f32[4,8,1], index: 2, kind: input, shape index: {}]
  %s3 = inlined_call_operand.vmem [shape: f32[4,8,1], index: 3, kind: output, shape index: {0}]
  %s4 = inlined_call_operand.vmem [shape: f32[4,8,1], index: 4, kind: output, shape index: {1}]
  %5 = xla_tuple %s3, %s4
  %s6 = sld [smem:[#allocation0]]
  $region61: #{scattering_batch_norm.2} parent=0
    _
  %s8 = ssub.s32 1, %s6
  %s9 = scalar_select 0, %s8, %s6
  loop: start=0, step=1, limit=6
  $region2: #{scattering_batch_norm.2} parent=0 // loop_pre_header
    _
  $region3: #{scattering_batch_norm.2} parent=0 // loop_header
    %s11 = sphi 0, %s15
    %p12 = scmp.ge.s32.totalorder %s11, 6
    %s18 = sphi 0, %s37
    %s19 = sphi 0, %s33
    %s20 = sphi 0, %s29
    %s21 = sphi 0, %s18
    %s22 = sphi 0, %s19
    %s23 = sphi 0, %s20
    %s24 = sphi 0, %s21
    %s25 = sphi 0, %s22
    %s26 = sphi 0, %s23
    %s44 = sphi 0, %s46
    %s47 = sphi 0, %s44
    %s48 = sphi 0, %s47
    %s64 = sphi 0, %s48
    %s70 = sphi 0, %s72
    %s73 = sphi 0, %s70
    %s74 = sphi 0, %s73
    %s90 = sphi 0, %s74
    %s96 = sphi 0, %s98
    %s99 = sphi 0, %s96
    %s100 = sphi 0, %s99
    %s116 = sphi 0, %s100
    %s122 = sphi 0, %s124
    %s125 = sphi 0, %s122
    %s126 = sphi 0, %s125
    %s142 = sphi 0, %s126
    %s148 = sphi 0, %s150
    %s151 = sphi 0, %s148
    %s152 = sphi 0, %s151
    %s168 = sphi 0, %s152
  $region4: #{scattering_batch_norm.2} parent=0 // loop_header_branch
    %14 = sbr.rel (%p12) target = $region8
  $region5: #{scattering_batch_norm.2} parent=0 // loop_body
    %s16 = ssub.s32 %s11, 1
    %s17 = ssub.s32 %s11, 2
    %s27 = sadd.s32 1, %s20
    %p28 = scmp.ge.s32.totalorder %s27, 1
    %s29 = scalar_select %p28, 0, %s27
    %s30 = sadd.s32 1, %s19
    %s31 = scalar_select %p28, %s30, %s19
    %p32 = scmp.ge.s32.totalorder %s31, 2
    %s33 = scalar_select %p32, 0, %s31
    %s34 = sadd.s32 1, %s18
    %s35 = scalar_select %p32, %s34, %s18
    %p36 = scmp.ge.s32.totalorder %s35, 2
    %s37 = scalar_select %p36, 0, %s35
    %s38 = ssub.s32 %s19, %s33
    %s39 = ssub.s32 %s18, %s37
    %s40 = sor.u32 %s38, %s39
    %s41 = ssub.s32 %s20, %s29
    %s42 = sor.u32 %s40, %s41
    %p43 = scmp.eq.s32.totalorder %s42, 0
    %s45 = sadd.s32 %s44, 1
    %s46 = scalar_select %p43, %s44, %s45
    %p49 = pneg %p43
    %p50 = scmp.eq.s32.totalorder %s11, 3
    %p51 = por %p49, %p50
    %p52 = scmp.ne.s32.totalorder %s44, %s47
    %p53 = scmp.eq.s32.totalorder %s11, 0
    %p54 = por %p52, %p53
    %p55 = scmp.ne.s32.totalorder %s44, %s47
    %p56 = scmp.eq.s32.totalorder %s16, 3
    %p57 = por %p55, %p56
    %p58 = scmp.ne.s32.totalorder %s47, %s48
    %p59 = scmp.eq.s32.totalorder %s16, 0
    %p60 = por %p58, %p59
    %p61 = scmp.ne.s32.totalorder %s47, %s48
    %p62 = scmp.eq.s32.totalorder %s17, 3
    %p63 = por %p61, %p62
    %p65 = scmp.ne.s32.totalorder %s48, %s64
    %p66 = scmp.eq.s32.totalorder %s17, 0
    %p67 = por %p65, %p66
    %s68 = ssub.s32 %s18, %s37
    %p69 = scmp.eq.s32.totalorder %s68, 0
    %s71 = sadd.s32 %s70, 1
    %s72 = scalar_select %p69, %s70, %s71
    %p75 = pneg %p69
    %p76 = scmp.eq.s32.totalorder %s11, 3
    %p77 = por %p75, %p76
    %p78 = scmp.ne.s32.totalorder %s70, %s73
    %p79 = scmp.eq.s32.totalorder %s11, 0
    %p80 = por %p78, %p79
    %p81 = scmp.ne.s32.totalorder %s70, %s73
    %p82 = scmp.eq.s32.totalorder %s16, 3
    %p83 = por %p81, %p82
    %p84 = scmp.ne.s32.totalorder %s73, %s74
    %p85 = scmp.eq.s32.totalorder %s16, 0
    %p86 = por %p84, %p85
    %p87 = scmp.ne.s32.totalorder %s73, %s74
    %p88 = scmp.eq.s32.totalorder %s17, 3
    %p89 = por %p87, %p88
    %p91 = scmp.ne.s32.totalorder %s74, %s90
    %p92 = scmp.eq.s32.totalorder %s17, 0
    %p93 = por %p91, %p92
    %s94 = ssub.s32 %s18, %s37
    %p95 = scmp.eq.s32.totalorder %s94, 0
    %s97 = sadd.s32 %s96, 1
    %s98 = scalar_select %p95, %s96, %s97
    %p101 = pneg %p95
    %p102 = scmp.eq.s32.totalorder %s11, 3
    %p103 = por %p101, %p102
    %p104 = scmp.ne.s32.totalorder %s96, %s99
    %p105 = scmp.eq.s32.totalorder %s11, 0
    %p106 = por %p104, %p105
    %p107 = scmp.ne.s32.totalorder %s96, %s99
    %p108 = scmp.eq.s32.totalorder %s16, 3
    %p109 = por %p107, %p108
    %p110 = scmp.ne.s32.totalorder %s99, %s100
    %p111 = scmp.eq.s32.totalorder %s16, 0
    %p112 = por %p110, %p111
    %p113 = scmp.ne.s32.totalorder %s99, %s100
    %p114 = scmp.eq.s32.totalorder %s17, 3
    %p115 = por %p113, %p114
    %p117 = scmp.ne.s32.totalorder %s100, %s116
    %p118 = scmp.eq.s32.totalorder %s17, 0
    %p119 = por %p117, %p118
    %s120 = ssub.s32 %s18, %s37
    %p121 = scmp.eq.s32.totalorder %s120, 0
    %s123 = sadd.s32 %s122, 1
    %s124 = scalar_select %p121, %s122, %s123
    %p127 = pneg %p121
    %p128 = scmp.eq.s32.totalorder %s11, 3
    %p129 = por %p127, %p128
    %p130 = scmp.ne.s32.totalorder %s122, %s125
    %p131 = scmp.eq.s32.totalorder %s11, 0
    %p132 = por %p130, %p131
    %p133 = scmp.ne.s32.totalorder %s122, %s125
    %p134 = scmp.eq.s32.totalorder %s16, 3
    %p135 = por %p133, %p134
    %p136 = scmp.ne.s32.totalorder %s125, %s126
    %p137 = scmp.eq.s32.totalorder %s16, 0
    %p138 = por %p136, %p137
    %p139 = scmp.ne.s32.totalorder %s125, %s126
    %p140 = scmp.eq.s32.totalorder %s17, 3
    %p141 = por %p139, %p140
    %p143 = scmp.ne.s32.totalorder %s126, %s142
    %p144 = scmp.eq.s32.totalorder %s17, 0
    %p145 = por %p143, %p144
    %s146 = ssub.s32 %s18, %s37
    %p147 = scmp.eq.s32.totalorder %s146, 0
    %s149 = sadd.s32 %s148, 1
    %s150 = scalar_select %p147, %s148, %s149
    %p153 = pneg %p147
    %p154 = scmp.eq.s32.totalorder %s11, 3
    %p155 = por %p153, %p154
    %p156 = scmp.ne.s32.totalorder %s148, %s151
    %p157 = scmp.eq.s32.totalorder %s11, 0
    %p158 = por %p156, %p157
    %p159 = scmp.ne.s32.totalorder %s148, %s151
    %p160 = scmp.eq.s32.totalorder %s16, 3
    %p161 = por %p159, %p160
    %p162 = scmp.ne.s32.totalorder %s151, %s152
    %p163 = scmp.eq.s32.totalorder %s16, 0
    %p164 = por %p162, %p163
    %p165 = scmp.ne.s32.totalorder %s151, %s152
    %p166 = scmp.eq.s32.totalorder %s17, 3
    %p167 = por %p165, %p166
    %p169 = scmp.ne.s32.totalorder %s152, %s168
    %p170 = scmp.eq.s32.totalorder %s17, 0
    %p171 = por %p169, %p170
    %p172 = scmp.le.s32.totalorder 1, %s11
    %p173 = scmp.lt.s32.totalorder %s11, 5
    %p174 = pnand %p172, %p173
    %p175 = pneg %p174
    // Predicated region
    $region9: #{scattering_batch_norm.2} parent=5 // pred_check
      _
    $region10: #{scattering_batch_norm.2} parent=5 // pred_check_branch
      %177 = sbr.rel (%p174) target = $region12
    $region11: #{scattering_batch_norm.2} parent=5 // pred_region
      %s178 = ssub.s32 %s11, 1
    $region12: #{scattering_batch_norm.2} parent=5 // pred_fallthru
      _
    %p179 = scmp.lt.s32.totalorder %s11, 4
    // Predicated region
    $region13: #{scattering_batch_norm.2} parent=5 // pred_check
      %p180 = pneg %p179
    $region14: #{scattering_batch_norm.2} parent=5 // pred_check_branch
      %182 = sbr.rel (%p180) target = $region16
    $region15: #{scattering_batch_norm.2} parent=5 // pred_region
      // Predicated region
      $region17: #{scattering_batch_norm.2} parent=15 // pred_check
        %p183 = pneg %p54
      $region18: #{scattering_batch_norm.2} parent=15 // pred_check_branch
        %185 = sbr.rel (%p183) target = $region20
      $region19: #{scattering_batch_norm.2} parent=15 // pred_region
        %s186 = smul.u32 2, %s18
        %p187 = scmp.lt.s32.totalorder %s19, 1
        %s188 = scalar_select %p187, %s19, 1
        %p189 = scmp.lt.s32.totalorder %s186, 3
        %s190 = scalar_select %p189, %s186, 3
        %p191 = scmp.lt.s32.totalorder %s20, 0
        %s192 = scalar_select %p191, %s20, 0
        %s193 = sadd.s32 %s192, %s190
        %s194 = smul.addr %s188, 4
        %s195 = sadd.s32 %s193, %s194
        %s196 = smul.addr %s195, 8
        %s197 = scalar_lea.vmem %s0, %s196
        %s198 = smul.u32 2, %s18
      $region20: #{scattering_batch_norm.2} parent=15 // pred_fallthru
        _
      // Predicated region
      $region21: #{scattering_batch_norm.2} parent=15 // pred_check
        %p199 = pneg %p80
      $region22: #{scattering_batch_norm.2} parent=15 // pred_check_branch
        %201 = sbr.rel (%p199) target = $region24
      $region23: #{scattering_batch_norm.2} parent=15 // pred_region
        %s202 = smul.u32 2, %s18
        %p203 = scmp.lt.s32.totalorder %s202, 3
        %s204 = scalar_select %p203, %s202, 3
        %s205 = smul.addr %s204, 8
        %s206 = scalar_lea.vmem %s1, %s205
        %s207 = smul.u32 2, %s18
      $region24: #{scattering_batch_norm.2} parent=15 // pred_fallthru
        _
      // Predicated region
      $region25: #{scattering_batch_norm.2} parent=15 // pred_check
        %p208 = pneg %p106
      $region26: #{scattering_batch_norm.2} parent=15 // pred_check_branch
        %210 = sbr.rel (%p208) target = $region28
      $region27: #{scattering_batch_norm.2} parent=15 // pred_region
        %s211 = smul.u32 2, %s18
        %p212 = scmp.lt.s32.totalorder %s211, 3
        %s213 = scalar_select %p212, %s211, 3
        %s214 = smul.addr %s213, 8
        %s215 = scalar_lea.vmem %s2, %s214
        %s216 = smul.u32 2, %s18
      $region28: #{scattering_batch_norm.2} parent=15 // pred_fallthru
        _
    $region16: #{scattering_batch_norm.2} parent=5 // pred_fallthru
      _
    %p217 = scmp.le.s32.totalorder 1, %s11
    %p218 = scmp.lt.s32.totalorder %s11, 5
    %p219 = pnand %p217, %p218
    %p220 = pneg %p219
    // Predicated region
    $region29: #{scattering_batch_norm.2} parent=5 // pred_check
      _
    $region30: #{scattering_batch_norm.2} parent=5 // pred_check_branch
      %222 = sbr.rel (%p219) target = $region32
    $region31: #{scattering_batch_norm.2} parent=5 // pred_region
      %s223 = ssub.s32 %s11, 1
      %s224 = smul.u32 2, %s21
      %p225 = scmp.lt.s32.totalorder %s22, 1
      %s226 = scalar_select %p225, %s22, 1
      %p227 = scmp.lt.s32.totalorder %s224, 3
      %s228 = scalar_select %p227, %s224, 3
      %p229 = scmp.lt.s32.totalorder %s23, 0
      %s230 = scalar_select %p229, %s23, 0
      %s231 = sadd.s32 %s230, %s228
      %s232 = smul.addr %s226, 4
      %s233 = sadd.s32 %s231, %s232
      %s234 = smul.addr %s233, 8
      %s235 = scalar_lea.vmem %s0, %s234
      %p236 = pneg %p60
      %p237 = pneg %p57
      %s238 = smul.u32 2, %s21
      %p239 = scmp.lt.s32.totalorder %s238, 3
      %s240 = scalar_select %p239, %s238, 3
      %s241 = smul.addr %s240, 8
      %s242 = scalar_lea.vmem %s1, %s241
      %p243 = pneg %p86
      %p244 = pneg %p83
      %s245 = smul.u32 2, %s21
      %p246 = scmp.lt.s32.totalorder %s245, 3
      %s247 = scalar_select %p246, %s245, 3
      %s248 = smul.addr %s247, 8
      %s249 = scalar_lea.vmem %s2, %s248
      %p250 = pneg %p112
      %p251 = pneg %p109
      %p252 = pneg %p138
      %p253 = pneg %p135
      %s254 = smul.u32 2, %s21
      %p255 = scmp.lt.s32.totalorder %s254, 3
      %s256 = scalar_select %p255, %s254, 3
      %s257 = smul.addr %s256, 8
      %s258 = scalar_lea.vmem %s3, %s257
      %p259 = pneg %p164
      %p260 = pneg %p161
      %s261 = smul.u32 2, %s21
      %p262 = scmp.lt.s32.totalorder %s261, 3
      %s263 = scalar_select %p262, %s261, 3
      %s264 = smul.addr %s263, 8
      %s265 = scalar_lea.vmem %s4, %s264
      %s266 = smul.u32 2, %s21
      %p267 = scmp.lt.s32.totalorder %s22, 1
      %s268 = scalar_select %p267, %s22, 1
      %p269 = scmp.lt.s32.totalorder %s266, 3
      %s270 = scalar_select %p269, %s266, 3
      %p271 = scmp.lt.s32.totalorder %s23, 0
      %s272 = scalar_select %p271, %s23, 0
      %s273 = sadd.s32 %s272, %s270
      %s274 = smul.addr %s268, 4
      %s275 = sadd.s32 %s273, %s274
      %s276 = smul.addr %s275, 8
      %s277 = scalar_lea.vmem %s0, %s276
      %s278 = smul.u32 2, %s21
      %s279 = smul.u32 2, %s21
      %p280 = scmp.lt.s32.totalorder %s279, 3
      %s281 = scalar_select %p280, %s279, 3
      %s282 = smul.addr %s281, 8
      %s283 = scalar_lea.vmem %s1, %s282
      %s284 = smul.u32 2, %s21
      %s285 = smul.u32 2, %s21
      %p286 = scmp.lt.s32.totalorder %s285, 3
      %s287 = scalar_select %p286, %s285, 3
      %s288 = smul.addr %s287, 8
      %s289 = scalar_lea.vmem %s2, %s288
      %s290 = smul.u32 2, %s21
      %s291 = smul.u32 2, %s21
      %p292 = scmp.lt.s32.totalorder %s291, 3
      %s293 = scalar_select %p292, %s291, 3
      %s294 = smul.addr %s293, 8
      %s295 = scalar_lea.vmem %s3, %s294
      %s296 = smul.u32 2, %s21
      %s297 = smul.u32 2, %s21
      %p298 = scmp.lt.s32.totalorder %s297, 3
      %s299 = scalar_select %p298, %s297, 3
      %s300 = smul.addr %s299, 8
      %s301 = scalar_lea.vmem %s4, %s300
      %s302 = smul.u32 2, %s21
      %p303 = scmp.eq.s32.totalorder %s22, 0
      %p304 = scmp.eq.s32.totalorder %s23, 0
      %p305 = pnand %p303, %p304
      %p306 = pneg %p305
      // Predicated region
      $region33: #{scattering_batch_norm.2} parent=31 // pred_check
        _
      $region34: #{scattering_batch_norm.2} parent=31 // pred_check_branch
        %308 = sbr.rel (%p305) target = $region36
      $region35: #{scattering_batch_norm.2} parent=31 // pred_region
        %vm309 = vcmask 7168
        %310 = vst.msk [vmem:[#allocation2] sm:$0xff] %vm309, 0.0
        %311 = vst.msk [vmem:[#allocation2 + $0x8] sm:$0xff] %vm309, 0.0
      $region36: #{scattering_batch_norm.2} parent=31 // pred_fallthru
        _
      %v312 = vld [vmem:[#allocation2] sm:$0xff]
      %v313 = vld [vmem:[#allocation2 + $0x8] sm:$0xff]
      %v314 = vld [vmem:[%s277] sm:$0xff]
      %v315 = vld [vmem:[%s277 + $0x8] sm:$0xff]
      %vm316 = vcmask 130048
      %v317 = vsel %vm316, %v314, 0.0
      %318 = vadd.xlane.f32.xlu0 %v317
      %v319 = vpop.xlane.xlu0 %318
      %v320 = vsel %vm316, %v315, 0.0
      %321 = vadd.xlane.f32.xlu0 %v320
      %v322 = vpop.xlane.xlu0 %321
      %v323 = vadd.f32 %v312, %v319
      %v324 = vadd.f32 %v313, %v322
      %vm325 = vcmask 7168
      %326 = vst.msk [vmem:[#allocation2] sm:$0xff] %vm325, %v323
      %327 = vst.msk [vmem:[#allocation2 + $0x8] sm:$0xff] %vm325, %v324
      %p328 = scmp.eq.s32.totalorder %s22, 1
      %p329 = pnand %p328, %p304
      %p330 = pneg %p329
      // Predicated region
      $region37: #{scattering_batch_norm.2} parent=31 // pred_check
        _
      $region38: #{scattering_batch_norm.2} parent=31 // pred_check_branch
        %332 = sbr.rel (%p329) target = $region40
      $region39: #{scattering_batch_norm.2} parent=31 // pred_region
        %v333 = vld [vmem:[#allocation2] sm:$0xff]
        %v334 = vld [vmem:[#allocation2 + $0x8] sm:$0xff]
        %v335 = vmul.f32 %v333, 0.03125
        %v336 = vmul.f32 %v334, 0.03125
        %v337 = vld [vmem:[%s283] sm:$0xff]
        %v338 = vld [vmem:[%s283 + $0x8] sm:$0xff]
        %v339 = vmul.f32 %v337, 0.33333334
        %v340 = vmul.f32 %v338, 0.33333334
        %v341 = vmul.f32 %v335, 0.6666667
        %v342 = vmul.f32 %v336, 0.6666667
        %v343 = vadd.f32 %v339, %v341
        %v344 = vadd.f32 %v340, %v342
        %345 = vst.msk [vmem:[%s295] sm:$0xff] %vm325, %v343
        %346 = vst.msk [vmem:[%s295 + $0x8] sm:$0xff] %vm325, %v344
        %v347 = vld [vmem:[%s289] sm:$0xff]
        %v348 = vld [vmem:[%s289 + $0x8] sm:$0xff]
        %v349 = vmul.f32 %v347, %v343
        %v350 = vmul.f32 %v348, %v344
        %v351 = vadd.f32 %v349, 0.001
        %v352 = vadd.f32 %v350, 0.001
        %v353 = vrcp.pop %v351
        %v354 = vmul.f32 1.0, %v353
        %v355 = vrcp.pop %v352
        %v356 = vmul.f32 1.0, %v355
        %357 = vst.msk [vmem:[%s301] sm:$0xff] %vm325, %v354
        %358 = vst.msk [vmem:[%s301 + $0x8] sm:$0xff] %vm325, %v356
      $region40: #{scattering_batch_norm.2} parent=31 // pred_fallthru
        _
      %s359 = smul.u32 2, %s21
      %p360 = scmp.lt.s32.totalorder %s359, 3
      %s361 = scalar_select %p360, %s359, 3
      %s362 = smul.addr %s361, 8
      %s363 = scalar_lea.vmem %s3, %s362
      %s364 = smul.u32 2, %s21
      %p365 = scmp.lt.s32.totalorder %s364, 3
      %s366 = scalar_select %p365, %s364, 3
      %s367 = smul.addr %s366, 8
      %s368 = scalar_lea.vmem %s4, %s367
      // Predicated region
      $region41: #{scattering_batch_norm.2} parent=31 // pred_check
        %p369 = pneg %p135
      $region42: #{scattering_batch_norm.2} parent=31 // pred_check_branch
        %371 = sbr.rel (%p369) target = $region44
      $region43: #{scattering_batch_norm.2} parent=31 // pred_region
        %s372 = smul.u32 2, %s21
      $region44: #{scattering_batch_norm.2} parent=31 // pred_fallthru
        _
      // Predicated region
      $region45: #{scattering_batch_norm.2} parent=31 // pred_check
        %p373 = pneg %p161
      $region46: #{scattering_batch_norm.2} parent=31 // pred_check_branch
        %375 = sbr.rel (%p373) target = $region48
      $region47: #{scattering_batch_norm.2} parent=31 // pred_region
        %s376 = smul.u32 2, %s21
      $region48: #{scattering_batch_norm.2} parent=31 // pred_fallthru
        _
    $region32: #{scattering_batch_norm.2} parent=5 // pred_fallthru
      _
    %p377 = scmp.le.s32.totalorder 2, %s11
    // Predicated region
    $region49: #{scattering_batch_norm.2} parent=5 // pred_check
      %p378 = pneg %p377
    $region50: #{scattering_batch_norm.2} parent=5 // pred_check_branch
      %380 = sbr.rel (%p378) target = $region52
    $region51: #{scattering_batch_norm.2} parent=5 // pred_region
      %s381 = ssub.s32 %s11, 2
      // Predicated region
      $region53: #{scattering_batch_norm.2} parent=51 // pred_check
        %p382 = pneg %p141
      $region54: #{scattering_batch_norm.2} parent=51 // pred_check_branch
        %384 = sbr.rel (%p382) target = $region56
      $region55: #{scattering_batch_norm.2} parent=51 // pred_region
        %s385 = smul.u32 2, %s24
        %p386 = scmp.lt.s32.totalorder %s385, 3
        %s387 = scalar_select %p386, %s385, 3
        %s388 = smul.addr %s387, 8
        %s389 = scalar_lea.vmem %s3, %s388
      $region56: #{scattering_batch_norm.2} parent=51 // pred_fallthru
        _
      // Predicated region
      $region57: #{scattering_batch_norm.2} parent=51 // pred_check
        %p390 = pneg %p167
      $region58: #{scattering_batch_norm.2} parent=51 // pred_check_branch
        %392 = sbr.rel (%p390) target = $region60
      $region59: #{scattering_batch_norm.2} parent=51 // pred_region
        %s393 = smul.u32 2, %s24
        %p394 = scmp.lt.s32.totalorder %s393, 3
        %s395 = scalar_select %p394, %s393, 3
        %s396 = smul.addr %s395, 8
        %s397 = scalar_lea.vmem %s4, %s396
      $region60: #{scattering_batch_norm.2} parent=51 // pred_fallthru
        _
    $region52: #{scattering_batch_norm.2} parent=5 // pred_fallthru
      _
  $region6: #{scattering_batch_norm.2} parent=0 // loop_footer
    %s15 = sadd.s32 1, %s11
  $region7: #{scattering_batch_norm.2} parent=0 // loop_footer_branch
    %10 = sbr.rel target = $region3
  $region8: #{scattering_batch_norm.2} parent=0 // loop_exit
    _

// kernel: scattering_batch_norm.3
$region0: #{scattering_batch_norm.3}
  #allocation0 [shape = 'u32[]', space=smem, size = 0x4, offset = 0x4, fixed_abs, tag = 'smem constant byte address 0x4 - core index']
  #allocation1 [shape = 'u32[144,128]{1,0:T(1,128)}', space=vmem, size = 0x12000, scoped, tag = 'internal scratch']
  %s0 = inlined_call_operand.vmem [shape: f32[2,4,8,16], index: 0, kind: input, shape index: {}]
  %s1 = inlined_call_operand.vmem [shape: f32[4,8,1], index: 1, kind: input, shape index: {}]
  %s2 = inlined_call_operand.hbm [shape: f32[2,4,8,16], index: 2, kind: output, shape index: {}]
  %s3 = sld [smem:[#allocation0]]
  $region41: #{scattering_batch_norm.3} parent=0
    _
  %s5 = ssub.s32 1, %s3
  %s6 = scalar_select 0, %s5, %s3
  $region1: #{scattering_batch_norm.3} parent=0
    #allocation2 [shape = 'u8[32768]{0}', space=vmem, size = 0x8000, scoped, tag = 'output window, operand 0']
    #allocation3 [shape = 's32[2]{0}', space=sflag, size = 0x8, scoped, tag = 'scoped memory for scattering_batch_norm.3']
    %7 = vsyncpa [#allocation3], 0
    %s8 = scalar_lea.sflag [#allocation3], 1
    %9 = vsyncpa %s8, 0
    loop: start=0, step=1, limit=4
    $region2: #{scattering_batch_norm.3} parent=1 // loop_pre_header
      _
    $region3: #{scattering_batch_norm.3} parent=1 // loop_header
      %s11 = sphi 0, %s15
      %p12 = scmp.ge.s32.totalorder %s11, 4
      %s18 = sphi 0, %s37
      %s19 = sphi 0, %s33
      %s20 = sphi 0, %s29
      %s21 = sphi 0, %s18
      %s22 = sphi 0, %s19
      %s23 = sphi 0, %s20
      %s24 = sphi 0, %s21
      %s25 = sphi 0, %s22
      %s26 = sphi 0, %s23
      %s44 = sphi 0, %s46
      %s47 = sphi 0, %s44
      %s48 = sphi 0, %s47
      %s64 = sphi 0, %s48
      %s70 = sphi 0, %s72
      %s73 = sphi 0, %s70
      %s74 = sphi 0, %s73
      %s90 = sphi 0, %s74
      %s100 = sphi 0, %s102
      %s103 = sphi 0, %s100
      %s104 = sphi 0, %s103
      %s120 = sphi 0, %s104
    $region4: #{scattering_batch_norm.3} parent=1 // loop_header_branch
      %14 = sbr.rel (%p12) target = $region8
    $region5: #{scattering_batch_norm.3} parent=1 // loop_body
      %s16 = ssub.s32 %s11, 1
      %s17 = ssub.s32 %s11, 2
      %s27 = sadd.s32 1, %s20
      %p28 = scmp.ge.s32.totalorder %s27, 1
      %s29 = scalar_select %p28, 0, %s27
      %s30 = sadd.s32 1, %s19
      %s31 = scalar_select %p28, %s30, %s19
      %p32 = scmp.ge.s32.totalorder %s31, 2
      %s33 = scalar_select %p32, 0, %s31
      %s34 = sadd.s32 1, %s18
      %s35 = scalar_select %p32, %s34, %s18
      %p36 = scmp.ge.s32.totalorder %s35, 1
      %s37 = scalar_select %p36, 0, %s35
      %s38 = ssub.s32 %s19, %s33
      %s39 = ssub.s32 %s18, %s37
      %s40 = sor.u32 %s38, %s39
      %s41 = ssub.s32 %s20, %s29
      %s42 = sor.u32 %s40, %s41
      %p43 = scmp.eq.s32.totalorder %s42, 0
      %s45 = sadd.s32 %s44, 1
      %s46 = scalar_select %p43, %s44, %s45
      %p49 = pneg %p43
      %p50 = scmp.eq.s32.totalorder %s11, 1
      %p51 = por %p49, %p50
      %p52 = scmp.ne.s32.totalorder %s44, %s47
      %p53 = scmp.eq.s32.totalorder %s11, 0
      %p54 = por %p52, %p53
      %p55 = scmp.ne.s32.totalorder %s44, %s47
      %p56 = scmp.eq.s32.totalorder %s16, 1
      %p57 = por %p55, %p56
      %p58 = scmp.ne.s32.totalorder %s47, %s48
      %p59 = scmp.eq.s32.totalorder %s16, 0
      %p60 = por %p58, %p59
      %p61 = scmp.ne.s32.totalorder %s47, %s48
      %p62 = scmp.eq.s32.totalorder %s17, 1
      %p63 = por %p61, %p62
      %p65 = scmp.ne.s32.totalorder %s48, %s64
      %p66 = scmp.eq.s32.totalorder %s17, 0
      %p67 = por %p65, %p66
      %s68 = ssub.s32 %s18, %s37
      %p69 = scmp.eq.s32.totalorder %s68, 0
      %s71 = sadd.s32 %s70, 1
      %s72 = scalar_select %p69, %s70, %s71
      %p75 = pneg %p69
      %p76 = scmp.eq.s32.totalorder %s11, 1
      %p77 = por %p75, %p76
      %p78 = scmp.ne.s32.totalorder %s70, %s73
      %p79 = scmp.eq.s32.totalorder %s11, 0
      %p80 = por %p78, %p79
      %p81 = scmp.ne.s32.totalorder %s70, %s73
      %p82 = scmp.eq.s32.totalorder %s16, 1
      %p83 = por %p81, %p82
      %p84 = scmp.ne.s32.totalorder %s73, %s74
      %p85 = scmp.eq.s32.totalorder %s16, 0
      %p86 = por %p84, %p85
      %p87 = scmp.ne.s32.totalorder %s73, %s74
      %p88 = scmp.eq.s32.totalorder %s17, 1
      %p89 = por %p87, %p88
      %p91 = scmp.ne.s32.totalorder %s74, %s90
      %p92 = scmp.eq.s32.totalorder %s17, 0
      %p93 = por %p91, %p92
      %s94 = ssub.s32 %s19, %s33
      %s95 = ssub.s32 %s18, %s37
      %s96 = sor.u32 %s94, %s95
      %s97 = ssub.s32 %s20, %s29
      %s98 = sor.u32 %s96, %s97
      %p99 = scmp.eq.s32.totalorder %s98, 0
      %s101 = sadd.s32 %s100, 1
      %s102 = scalar_select %p99, %s100, %s101
      %p105 = pneg %p99
      %p106 = scmp.eq.s32.totalorder %s11, 1
      %p107 = por %p105, %p106
      %p108 = scmp.ne.s32.totalorder %s100, %s103
      %p109 = scmp.eq.s32.totalorder %s11, 0
      %p110 = por %p108, %p109
      %p111 = scmp.ne.s32.totalorder %s100, %s103
      %p112 = scmp.eq.s32.totalorder %s16, 1
      %p113 = por %p111, %p112
      %p114 = scmp.ne.s32.totalorder %s103, %s104
      %p115 = scmp.eq.s32.totalorder %s16, 0
      %p116 = por %p114, %p115
      %p117 = scmp.ne.s32.totalorder %s103, %s104
      %p118 = scmp.eq.s32.totalorder %s17, 1
      %p119 = por %p117, %p118
      %p121 = scmp.ne.s32.totalorder %s104, %s120
      %p122 = scmp.eq.s32.totalorder %s17, 0
      %p123 = por %p121, %p122
      %p124 = scmp.le.s32.totalorder 1, %s11
      %p125 = scmp.lt.s32.totalorder %s11, 3
      %p126 = pnand %p124, %p125
      %p127 = pneg %p126
      // Predicated region
      $region9: #{scattering_batch_norm.3} parent=5 // pred_check
        _
      $region10: #{scattering_batch_norm.3} parent=5 // pred_check_branch
        %129 = sbr.rel (%p126) target = $region12
      $region11: #{scattering_batch_norm.3} parent=5 // pred_region
        %s130 = ssub.s32 %s11, 1
        // Predicated region
        $region13: #{scattering_batch_norm.3} parent=11 // pred_check
          %p131 = pneg %p86
        $region14: #{scattering_batch_norm.3} parent=11 // pred_check_branch
          %133 = sbr.rel (%p131) target = $region16
        $region15: #{scattering_batch_norm.3} parent=11 // pred_region
          %s134 = smul.u32 4, %s21
          %p135 = scmp.lt.s32.totalorder %s134, 3
          %s136 = scalar_select %p135, %s134, 3
          %s137 = smul.addr %s136, 8
          %s138 = scalar_lea.vmem %s1, %s137
          %s139 = smul.u32 4, %s21
        $region16: #{scattering_batch_norm.3} parent=11 // pred_fallthru
          _
      $region12: #{scattering_batch_norm.3} parent=5 // pred_fallthru
        _
      %p140 = scmp.lt.s32.totalorder %s11, 2
      // Predicated region
      $region17: #{scattering_batch_norm.3} parent=5 // pred_check
        %p141 = pneg %p140
      $region18: #{scattering_batch_norm.3} parent=5 // pred_check_branch
        %143 = sbr.rel (%p141) target = $region20
      $region19: #{scattering_batch_norm.3} parent=5 // pred_region
        // Predicated region
        $region21: #{scattering_batch_norm.3} parent=19 // pred_check
          %p144 = pneg %p54
        $region22: #{scattering_batch_norm.3} parent=19 // pred_check_branch
          %146 = sbr.rel (%p144) target = $region24
        $region23: #{scattering_batch_norm.3} parent=19 // pred_region
          %s147 = smul.u32 4, %s18
          %p148 = scmp.lt.s32.totalorder %s19, 1
          %s149 = scalar_select %p148, %s19, 1
          %p150 = scmp.lt.s32.totalorder %s147, 3
          %s151 = scalar_select %p150, %s147, 3
          %p152 = scmp.lt.s32.totalorder %s20, 0
          %s153 = scalar_select %p152, %s20, 0
          %s154 = sadd.s32 %s153, %s151
          %s155 = smul.addr %s149, 4
          %s156 = sadd.s32 %s154, %s155
          %s157 = smul.addr %s156, 8
          %s158 = scalar_lea.vmem %s0, %s157
          %s159 = smul.u32 4, %s18
        $region24: #{scattering_batch_norm.3} parent=19 // pred_fallthru
          _
      $region20: #{scattering_batch_norm.3} parent=5 // pred_fallthru
        _
      %p160 = scmp.le.s32.totalorder 1, %s11
      %p161 = scmp.lt.s32.totalorder %s11, 3
      %p162 = pnand %p160, %p161
      %p163 = pneg %p162
      // Predicated region
      $region25: #{scattering_batch_norm.3} parent=5 // pred_check
        _
      $region26: #{scattering_batch_norm.3} parent=5 // pred_check_branch
        %165 = sbr.rel (%p162) target = $region28
      $region27: #{scattering_batch_norm.3} parent=5 // pred_region
        %s166 = ssub.s32 %s11, 1
        %s167 = smul.u32 4, %s21
        %p168 = scmp.lt.s32.totalorder %s22, 1
        %s169 = scalar_select %p168, %s22, 1
        %p170 = scmp.lt.s32.totalorder %s167, 3
        %s171 = scalar_select %p170, %s167, 3
        %p172 = scmp.lt.s32.totalorder %s23, 0
        %s173 = scalar_select %p172, %s23, 0
        %s174 = sadd.s32 %s173, %s171
        %s175 = smul.addr %s169, 4
        %s176 = sadd.s32 %s174, %s175
        %s177 = smul.addr %s176, 8
        %s178 = scalar_lea.vmem %s0, %s177
        %p179 = pneg %p60
        %p180 = pneg %p57
        %s181 = smul.u32 4, %s21
        %p182 = scmp.lt.s32.totalorder %s181, 3
        %s183 = scalar_select %p182, %s181, 3
        %s184 = smul.addr %s183, 8
        %s185 = scalar_lea.vmem %s1, %s184
        %p186 = pneg %p86
        %p187 = pneg %p83
        %p188 = pneg %p116
        %p189 = pneg %p113
        %s190 = sand.u32 %s103, 1
        %s191 = scalar_lea.sflag [#allocation3], %s190
        %s192 = sand.u32 %s103, 1
        %s193 = smul.addr %s192, 32
        %s194 = scalar_lea.vmem [#allocation2], %s193
        %s195 = smul.u32 4, %s21
        %p196 = scmp.lt.s32.totalorder %s22, 1
        %s197 = scalar_select %p196, %s22, 1
        %p198 = scmp.lt.s32.totalorder %s195, 3
        %s199 = scalar_select %p198, %s195, 3
        %p200 = scmp.lt.s32.totalorder %s23, 0
        %s201 = scalar_select %p200, %s23, 0
        %s202 = sadd.s32 %s201, %s199
        %s203 = smul.addr %s197, 4
        %s204 = sadd.s32 %s202, %s203
        %s205 = smul.addr %s204, 8
        %s206 = scalar_lea.vmem %s0, %s205
        %s207 = smul.u32 4, %s21
        %s208 = smul.u32 4, %s21
        %p209 = scmp.lt.s32.totalorder %s208, 3
        %s210 = scalar_select %p209, %s208, 3
        %s211 = smul.addr %s210, 8
        %s212 = scalar_lea.vmem %s1, %s211
        %s213 = smul.u32 4, %s21
        %s214 = smul.u32 4, %s21
        %v215 = vld [vmem:[%s212] sm:$0xff]
        %v216 = vld [vmem:[%s212 + $0x8] sm:$0xff]
        %v217 = vld [vmem:[%s212 + $0x10] sm:$0xff]
        %v218 = vld [vmem:[%s212 + $0x18] sm:$0xff]
        %v219 = vld [vmem:[%s206] sm:$0xff]
        %v220 = vld [vmem:[%s206 + $0x8] sm:$0xff]
        %v221 = vld [vmem:[%s206 + $0x10] sm:$0xff]
        %v222 = vld [vmem:[%s206 + $0x18] sm:$0xff]
        %224 = vset.pattern.permute.xlu0 0
        %225 = vperm.xlu0 %224, %v215
        %v226 = vpop.permute.xlu0 %225
        %229 = vset.pattern.permute.xlu0 0
        %230 = vperm.xlu0 %229, %v216
        %v231 = vpop.permute.xlu0 %230
        %234 = vset.pattern.permute.xlu0 0
        %235 = vperm.xlu0 %234, %v217
        %v236 = vpop.permute.xlu0 %235
        %239 = vset.pattern.permute.xlu0 0
        %240 = vperm.xlu0 %239, %v218
        %v241 = vpop.permute.xlu0 %240
        %v243 = vmul.f32 %v219, %v226
        %v244 = vmul.f32 %v220, %v231
        %v245 = vmul.f32 %v221, %v236
        %v246 = vmul.f32 %v222, %v241
        %vm247 = vcmask 130048
        %248 = vst.msk [vmem:[%s194] sm:$0xff] %vm247, %v243
        %249 = vst.msk [vmem:[%s194 + $0x8] sm:$0xff] %vm247, %v244
        %250 = vst.msk [vmem:[%s194 + $0x10] sm:$0xff] %vm247, %v245
        %251 = vst.msk [vmem:[%s194 + $0x18] sm:$0xff] %vm247, %v246
        %s252 = sand.u32 %s103, 1
        %s253 = scalar_lea.sflag [#allocation3], %s252
        %s254 = sand.u32 %s103, 1
        %s255 = smul.addr %s254, 32
        %s256 = scalar_lea.vmem [#allocation2], %s255
        // Predicated region
        $region29: #{scattering_batch_norm.3} parent=27 // pred_check
          %p257 = pneg %p113
        $region30: #{scattering_batch_norm.3} parent=27 // pred_check_branch
          %259 = sbr.rel (%p257) target = $region32
        $region31: #{scattering_batch_norm.3} parent=27 // pred_region
          %s260 = smul.u32 4, %s21
          %s262 = ssub.s32 512, 512
          %263 = vsyncadd %s253, %s262
          %s264 = sadd.s32 %s23, %s260
          %s265 = smul.addr %s22, 4
          %s266 = sadd.s32 %s264, %s265
          %s267 = smul.addr %s266, 128
          %s268 = scalar_lea.hbm %s2, %s267
          %s269 = sshll.u32 %s256, 4
          %s270 = int_to_ptr.vmem [resolvable:$true] %s269
          %275 = dma.vmem_to_hbm [thread:$0]  %s270, 512, %s268, %s253, 128, 128, 8
        $region32: #{scattering_batch_norm.3} parent=27 // pred_fallthru
          _
      $region28: #{scattering_batch_norm.3} parent=5 // pred_fallthru
        _
      %p276 = scmp.le.s32.totalorder 2, %s11
      // Predicated region
      $region33: #{scattering_batch_norm.3} parent=5 // pred_check
        %p277 = pneg %p276
      $region34: #{scattering_batch_norm.3} parent=5 // pred_check_branch
        %279 = sbr.rel (%p277) target = $region36
      $region35: #{scattering_batch_norm.3} parent=5 // pred_region
        %s280 = ssub.s32 %s11, 2
        // Predicated region
        $region37: #{scattering_batch_norm.3} parent=35 // pred_check
          %p281 = pneg %p119
        $region38: #{scattering_batch_norm.3} parent=35 // pred_check_branch
          %283 = sbr.rel (%p281) target = $region40
        $region39: #{scattering_batch_norm.3} parent=35 // pred_region
          %s284 = sand.u32 %s104, 1
          %s285 = scalar_lea.sflag [#allocation3], %s284
          %s286 = sand.u32 %s104, 1
          %s287 = smul.addr %s286, 32
          %s288 = scalar_lea.vmem [#allocation2], %s287
          %289 = dma.done %s285, 512
        $region40: #{scattering_batch_norm.3} parent=35 // pred_fallthru
          _
      $region36: #{scattering_batch_norm.3} parent=5 // pred_fallthru
        _
    $region6: #{scattering_batch_norm.3} parent=1 // loop_footer
      %s15 = sadd.s32 1, %s11
    $region7: #{scattering_batch_norm.3} parent=1 // loop_footer_branch
      %10 = sbr.rel target = $region3
    $region8: #{scattering_batch_norm.3} parent=1 // loop_exit
      _
    %290 = vsyncpa [#allocation3], 1
    %s291 = scalar_lea.sflag [#allocation3], 1
    %292 = vsyncpa %s291, 1

</llo_original>
